<compile_context>
chip_gen: v5e
topology: v5e:2x2
jax: 0.10.0
libtpu: 0.0.40
codegen_flags: <defaults>
</compile_context>

<pallas_src>
import math

import jax
import jax.numpy as jnp
from jax.experimental import pallas as pl
from jax.experimental.pallas import tpu as pltpu

LEAKY_SLOPE = 0.01          # F.leaky_relu default negative_slope
LANES = 128                 # TPU lane width
BF16_SUBLANES = 16          # bf16 sublane-packing granularity


def _leaky_relu(x):
    return jnp.where(x > 0, x, LEAKY_SLOPE * x)


def _round_up(x, m):
    return -(-x // m) * m


# ---------------------------------------------------------------------------
# Parameter packing (done once, outside the kernel)
# ---------------------------------------------------------------------------
def pack_params(params):
    """Pack weights into one bf16 buffer and biases into one f32 buffer.

    Layout (rows, all zero-padded to lane-dense 128-multiples in columns):
        [0   : Sp )           w1   (state_size -> fc1)
        [Sp  : Sp+F1p)        w2_s (fc1 -> fc2)
        [..  : ..+Ap)         w2_a (action -> fc2)
        [..  : ..+F2p)        w3   (fc2 -> n_atoms)
    Biases: rows 0/1/2 of an (8, cols) f32 buffer.
    """
    w1, b1 = params["w1"], params["b1"]
    w2s, w2a, b2 = params["w2_s"], params["w2_a"], params["b2"]
    w3, b3 = params["w3"], params["b3"]

    S, F1 = w1.shape
    A, F2 = w2a.shape
    N = w3.shape[1]

    Sp = _round_up(S, BF16_SUBLANES)
    Ap = _round_up(A, BF16_SUBLANES)
    F1p = _round_up(F1, LANES)
    F2p = _round_up(F2, LANES)
    Np = _round_up(N, LANES)
    cols = max(F1p, F2p, Np)

    def pad_to(x, rows, c):
        return jnp.pad(x, ((0, rows - x.shape[0]), (0, c - x.shape[1])))

    w_packed = jnp.concatenate(
        [pad_to(w1, Sp, cols),
         pad_to(w2s, F1p, cols),
         pad_to(w2a, Ap, cols),
         pad_to(w3, F2p, cols)],
        axis=0).astype(jnp.bfloat16)

    b_packed = jnp.concatenate(
        [pad_to(b1, 1, cols),
         pad_to(b2, 1, cols),
         pad_to(b3, 1, cols),
         jnp.zeros((5, cols), jnp.float32)],
        axis=0).astype(jnp.float32)

    dims = dict(S=S, A=A, F1=F1, F2=F2, N=N,
                Sp=Sp, Ap=Ap, F1p=F1p, F2p=F2p, Np=Np, cols=cols)
    return w_packed, b_packed, dims


# ---------------------------------------------------------------------------
# Kernel
# ---------------------------------------------------------------------------
def _make_kernel(dims):
    Sp, Ap = dims["Sp"], dims["Ap"]
    F1p, F2p, Np = dims["F1p"], dims["F2p"], dims["Np"]
    r1 = Sp               # end of w1 rows
    r2 = r1 + F1p         # end of w2_s rows
    r3 = r2 + Ap          # end of w2_a rows
    r4 = r3 + F2p         # end of w3 rows

    def kernel(state_ref, action_ref, w_ref, b_ref, out_ref):
        # bf16 MXU inputs, f32 accumulation.
        x_s = state_ref[...].astype(jnp.bfloat16)      # (bt, Sp)
        x_a = action_ref[...].astype(jnp.bfloat16)     # (bt, Ap), zero-padded

        w1 = w_ref[0:r1, 0:F1p]        # (Sp,  F1p) bf16
        w2s = w_ref[r1:r2, 0:F2p]      # (F1p, F2p)
        w2a = w_ref[r2:r3, 0:F2p]      # (Ap,  F2p)
        w3 = w_ref[r3:r4, 0:Np]        # (F2p, Np)
        b1 = b_ref[0:1, 0:F1p]         # f32 biases
        b2 = b_ref[1:2, 0:F2p]
        b3 = b_ref[2:3, 0:Np]

        # fc1 + leaky_relu (padded lanes stay exactly 0: zero weights/bias).
        h1 = jnp.dot(x_s, w1, preferred_element_type=jnp.float32) + b1
        h1 = _leaky_relu(h1)

        # fc2 on cat((h1, action)) == h1 @ w2_s + action @ w2_a
        h2 = (jnp.dot(h1.astype(jnp.bfloat16), w2s,
                      preferred_element_type=jnp.float32)
              + jnp.dot(x_a, w2a, preferred_element_type=jnp.float32)
              + b2)
        h2 = _leaky_relu(h2)

        # fc3 (no activation); lane-dense 128-wide store, sliced to n_atoms
        # by the wrapper.
        out_ref[...] = (jnp.dot(h2.astype(jnp.bfloat16), w3,
                                preferred_element_type=jnp.float32)
                        + b3).astype(out_ref.dtype)

    return kernel


# ---------------------------------------------------------------------------
# Wrapper
# ---------------------------------------------------------------------------
def critic_d4pg_forward(state, action, packed, *, batch_tile=256):
    w_packed, b_packed, dims = packed
    B = state.shape[0]
    Sp, Ap, Np, cols = dims["Sp"], dims["Ap"], dims["Np"], dims["cols"]
    n_rows = w_packed.shape[0]

    # Batch tiling: small batches run in one step; large batches tile at
    # `batch_tile` (256 matches v6e/v7x MXU height) with a parallel grid axis.
    bt = min(batch_tile, _round_up(B, 8))
    Bp = _round_up(B, bt)

    state_p = jnp.pad(state.astype(jnp.float32),
                      ((0, Bp - B), (0, Sp - state.shape[1])))
    action_p = jnp.pad(action.astype(jnp.float32),
                       ((0, Bp - B), (0, Ap - action.shape[1])))

    flops = 2 * B * (dims["S"] * dims["F1"]
                     + (dims["F1"] + dims["A"]) * dims["F2"]
                     + dims["F2"] * dims["N"])
    bytes_accessed = (state_p.size * 4 + action_p.size * 4
                      + w_packed.size * 2 + b_packed.size * 4 + Bp * Np * 4)

    out_padded = pl.pallas_call(
        _make_kernel(dims),
        out_shape=jax.ShapeDtypeStruct((Bp, Np), jnp.float32),
        grid_spec=pltpu.PrefetchScalarGridSpec(
            num_scalar_prefetch=0,
            grid=(Bp // bt,),
            in_specs=[
                pl.BlockSpec((bt, Sp), lambda i: (i, 0)),
                pl.BlockSpec((bt, Ap), lambda i: (i, 0)),
                # weights/biases stay resident across all batch tiles
                pl.BlockSpec((n_rows, cols), lambda i: (0, 0)),
                pl.BlockSpec((8, cols), lambda i: (0, 0)),
            ],
            out_specs=pl.BlockSpec((bt, Np), lambda i: (i, 0)),
        ),
        compiler_params=pltpu.CompilerParams(
            dimension_semantics=("parallel",)),
        cost_estimate=pl.CostEstimate(flops=flops, transcendentals=0,
                                      bytes_accessed=bytes_accessed),
    )(state_p, action_p, w_packed, b_packed)

    return out_padded[:B, :dims["N"]]


# ---------------------------------------------------------------------------
# Init + pure-JAX reference (mirrors the PyTorch module)
# ---------------------------------------------------------------------------
def init_params(key, state_size, action_size, fc1_units, fc2_units, n_atoms):
    """Deterministic init mirroring CriticD4PG.reset_parameters().

    hidden_init uses weight.size()[0] (== out_features in PyTorch), so
    lim = 1/sqrt(out_features) for fc1/fc2; fc3 weight ~ U(-3e-3, 3e-3).
    Biases use PyTorch's default Linear init U(-1/sqrt(in), 1/sqrt(in)).
    """
    ks = jax.random.split(key, 8)
    lim1 = 1.0 / math.sqrt(fc1_units)
    lim2 = 1.0 / math.sqrt(fc2_units)
    b1_lim = 1.0 / math.sqrt(state_size)
    b2_lim = 1.0 / math.sqrt(fc1_units + action_size)
    b3_lim = 1.0 / math.sqrt(fc2_units)

    w1 = jax.random.uniform(ks[0], (state_size, fc1_units),
                            minval=-lim1, maxval=lim1, dtype=jnp.float32)
    b1 = jax.random.uniform(ks[1], (1, fc1_units),
                            minval=-b1_lim, maxval=b1_lim, dtype=jnp.float32)
    w2_s = jax.random.uniform(ks[2], (fc1_units, fc2_units),
                              minval=-lim2, maxval=lim2, dtype=jnp.float32)
    w2_a = jax.random.uniform(ks[3], (action_size, fc2_units),
                              minval=-lim2, maxval=lim2, dtype=jnp.float32)
    b2 = jax.random.uniform(ks[4], (1, fc2_units),
                            minval=-b2_lim, maxval=b2_lim, dtype=jnp.float32)
    w3 = jax.random.uniform(ks[5], (fc2_units, n_atoms),
                            minval=-0.003, maxval=0.003, dtype=jnp.float32)
    b3 = jax.random.uniform(ks[6], (1, n_atoms),
                            minval=-b3_lim, maxval=b3_lim, dtype=jnp.float32)
    return {"w1": w1, "b1": b1, "w2_s": w2_s, "w2_a": w2_a,
            "b2": b2, "w3": w3, "b3": b3}


def reference_forward(state, action, params):
    """Pure-JAX f32 reference of the PyTorch forward (mode=1, leaky_relu)."""
    xs = _leaky_relu(state @ params["w1"] + params["b1"])
    x = jnp.concatenate([xs, action], axis=1)
    w2 = jnp.concatenate([params["w2_s"], params["w2_a"]], axis=0)
    x = _leaky_relu(x @ w2 + params["b2"])
    return x @ params["w3"] + params["b3"]


if __name__ == "__main__":
    # Small shapes consistent with the module's constructor defaults.
    batch, state_size, action_size = 8, 16, 4
    fc1_units, fc2_units, n_atoms = 64, 64, 51
    # `supports` buffer (v_min..v_max) is unused by forward().
    # TODO(synk): distr_to_q (softmax * supports reduction) not implemented.

    key = jax.random.PRNGKey(0)
    k_state, k_action, k_params = jax.random.split(key, 3)
    state = jax.random.normal(k_state, (batch, state_size), dtype=jnp.float32)
    action = jax.random.normal(k_action, (batch, action_size), dtype=jnp.float32)
    params = init_params(k_params, state_size, action_size,
                         fc1_units, fc2_units, n_atoms)
    packed = pack_params(params)

    out = critic_d4pg_forward(state, action, packed)
    out = jax.block_until_ready(out)

    ref = reference_forward(state, action, params)
    assert out.shape == (batch, n_atoms)
    # bf16 MXU inputs with f32 accumulation -> loosened tolerance vs f32 ref.
    assert jnp.allclose(out, ref, atol=2e-2, rtol=2e-2), \
        float(jnp.max(jnp.abs(out - ref)))

    print("KERNEL_OK")
</pallas_src>

<mosaic_0001>
module attributes {stable_mosaic.version = 11 : i64} {
  func.func @kernel(%arg0: i32, %arg1: memref<8x16xf32, #tpu.memory_space<vmem>>, %arg2: memref<8x16xf32, #tpu.memory_space<vmem>>, %arg3: memref<288x128xbf16, #tpu.memory_space<vmem>>, %arg4: memref<8x128xf32, #tpu.memory_space<vmem>>, %arg5: memref<8x128xf32, #tpu.memory_space<vmem>>) attributes {dimension_semantics = [#tpu.dimension_semantics<parallel>], iteration_bounds = array<i64: 1>, scalar_prefetch = 0 : i64, scratch_operands = 0 : i64, tpu.core_type = #tpu.core_type<tc>, window_params = [{transform_indices = @transform_0, window_bounds = array<i64: 8, 16>}, {transform_indices = @transform_1, window_bounds = array<i64: 8, 16>}, {pipeline_mode = #tpu.pipeline_mode<synchronous>, transform_indices = @transform_2, window_bounds = array<i64: 288, 128>}, {pipeline_mode = #tpu.pipeline_mode<synchronous>, transform_indices = @transform_3, window_bounds = array<i64: 8, 128>}, {transform_indices = @transform_4, window_bounds = array<i64: 8, 128>}]} {
    %c0 = arith.constant 0 : index
    %c0_0 = arith.constant 0 : index
    %0 = vector.load %arg1[%c0, %c0_0] : memref<8x16xf32, #tpu.memory_space<vmem>>, vector<8x16xf32>
    %1 = arith.truncf %0 : vector<8x16xf32> to vector<8x16xbf16>
    %c0_1 = arith.constant 0 : index
    %c0_2 = arith.constant 0 : index
    %2 = vector.load %arg2[%c0_1, %c0_2] : memref<8x16xf32, #tpu.memory_space<vmem>>, vector<8x16xf32>
    %3 = arith.truncf %2 : vector<8x16xf32> to vector<8x16xbf16>
    %c0_3 = arith.constant 0 : index
    %c0_4 = arith.constant 0 : index
    %4 = vector.load %arg3[%c0_3, %c0_4] : memref<288x128xbf16, #tpu.memory_space<vmem>>, vector<16x128xbf16>
    %c16 = arith.constant 16 : index
    %c0_5 = arith.constant 0 : index
    %5 = vector.load %arg3[%c16, %c0_5] : memref<288x128xbf16, #tpu.memory_space<vmem>>, vector<128x128xbf16>
    %c144 = arith.constant 144 : index
    %c0_6 = arith.constant 0 : index
    %6 = vector.load %arg3[%c144, %c0_6] : memref<288x128xbf16, #tpu.memory_space<vmem>>, vector<16x128xbf16>
    %c160 = arith.constant 160 : index
    %c0_7 = arith.constant 0 : index
    %7 = vector.load %arg3[%c160, %c0_7] : memref<288x128xbf16, #tpu.memory_space<vmem>>, vector<128x128xbf16>
    %c0_8 = arith.constant 0 : index
    %c0_9 = arith.constant 0 : index
    %8 = vector.load %arg4[%c0_8, %c0_9] : memref<8x128xf32, #tpu.memory_space<vmem>>, vector<1x128xf32>
    %c1 = arith.constant 1 : index
    %c0_10 = arith.constant 0 : index
    %9 = vector.load %arg4[%c1, %c0_10] : memref<8x128xf32, #tpu.memory_space<vmem>>, vector<1x128xf32>
    %c2 = arith.constant 2 : index
    %c0_11 = arith.constant 0 : index
    %10 = vector.load %arg4[%c2, %c0_11] : memref<8x128xf32, #tpu.memory_space<vmem>>, vector<1x128xf32>
    %cst = arith.constant dense<0.000000e+00> : vector<8x128xf32>
    %11 = tpu.matmul %1, %4, %cst {dimension_numbers = #tpu.dot_dimension_numbers<[1], [0], [0], [1], [0, 0, 1, 1], [], []>} : vector<8x16xbf16>, vector<16x128xbf16>, vector<8x128xf32> -> vector<8x128xf32>
    %12 = vector.broadcast %8 : vector<1x128xf32> to vector<8x128xf32>
    %13 = arith.addf %11, %12 : vector<8x128xf32>
    %cst_12 = arith.constant 0.000000e+00 : f32
    %14 = vector.broadcast %cst_12 : f32 to vector<8x128xf32>
    %15 = arith.cmpf ogt, %13, %14 : vector<8x128xf32>
    %cst_13 = arith.constant 0.00999999977 : f32
    %16 = vector.broadcast %cst_13 : f32 to vector<8x128xf32>
    %17 = arith.mulf %16, %13 : vector<8x128xf32>
    %18 = arith.select %15, %13, %17 : vector<8x128xi1>, vector<8x128xf32>
    %19 = arith.truncf %18 : vector<8x128xf32> to vector<8x128xbf16>
    %cst_14 = arith.constant dense<0.000000e+00> : vector<8x128xf32>
    %20 = tpu.matmul %19, %5, %cst_14 {dimension_numbers = #tpu.dot_dimension_numbers<[1], [0], [0], [1], [0, 0, 1, 1], [], []>} : vector<8x128xbf16>, vector<128x128xbf16>, vector<8x128xf32> -> vector<8x128xf32>
    %cst_15 = arith.constant dense<0.000000e+00> : vector<8x128xf32>
    %21 = tpu.matmul %3, %6, %cst_15 {dimension_numbers = #tpu.dot_dimension_numbers<[1], [0], [0], [1], [0, 0, 1, 1], [], []>} : vector<8x16xbf16>, vector<16x128xbf16>, vector<8x128xf32> -> vector<8x128xf32>
    %22 = arith.addf %20, %21 : vector<8x128xf32>
    %23 = vector.broadcast %9 : vector<1x128xf32> to vector<8x128xf32>
    %24 = arith.addf %22, %23 : vector<8x128xf32>
    %cst_16 = arith.constant 0.000000e+00 : f32
    %25 = vector.broadcast %cst_16 : f32 to vector<8x128xf32>
    %26 = arith.cmpf ogt, %24, %25 : vector<8x128xf32>
    %cst_17 = arith.constant 0.00999999977 : f32
    %27 = vector.broadcast %cst_17 : f32 to vector<8x128xf32>
    %28 = arith.mulf %27, %24 : vector<8x128xf32>
    %29 = arith.select %26, %24, %28 : vector<8x128xi1>, vector<8x128xf32>
    %30 = arith.truncf %29 : vector<8x128xf32> to vector<8x128xbf16>
    %cst_18 = arith.constant dense<0.000000e+00> : vector<8x128xf32>
    %31 = tpu.matmul %30, %7, %cst_18 {dimension_numbers = #tpu.dot_dimension_numbers<[1], [0], [0], [1], [0, 0, 1, 1], [], []>} : vector<8x128xbf16>, vector<128x128xbf16>, vector<8x128xf32> -> vector<8x128xf32>
    %32 = vector.broadcast %10 : vector<1x128xf32> to vector<8x128xf32>
    %33 = arith.addf %31, %32 : vector<8x128xf32>
    %c0_19 = arith.constant 0 : index
    %c0_20 = arith.constant 0 : index
    %34 = vector.load %arg5[%c0_19, %c0_20] : memref<8x128xf32, #tpu.memory_space<vmem>>, vector<8x128xf32>
    tpu.vector_store %arg5[%c0_19, %c0_20], %33 {strides = array<i32>} : memref<8x128xf32, #tpu.memory_space<vmem>>, vector<8x128xf32>,
    return
  }
  func.func @transform_0(%arg0: i32) -> (i32, i32) {
    %c0_i32 = arith.constant 0 : i32
    %c0_i32_0 = arith.constant 0 : i32
    return %arg0, %c0_i32 : i32, i32
  }
  func.func @transform_1(%arg0: i32) -> (i32, i32) {
    %c0_i32 = arith.constant 0 : i32
    %c0_i32_0 = arith.constant 0 : i32
    return %arg0, %c0_i32 : i32, i32
  }
  func.func @transform_2(%arg0: i32) -> (i32, i32) {
    %c0_i32 = arith.constant 0 : i32
    %c0_i32_0 = arith.constant 0 : i32
    %c0_i32_1 = arith.constant 0 : i32
    return %c0_i32, %c0_i32_0 : i32, i32
  }
  func.func @transform_3(%arg0: i32) -> (i32, i32) {
    %c0_i32 = arith.constant 0 : i32
    %c0_i32_0 = arith.constant 0 : i32
    %c0_i32_1 = arith.constant 0 : i32
    return %c0_i32, %c0_i32_0 : i32, i32
  }
  func.func @transform_4(%arg0: i32) -> (i32, i32) {
    %c0_i32 = arith.constant 0 : i32
    %c0_i32_0 = arith.constant 0 : i32
    return %arg0, %c0_i32 : i32, i32
  }
}

</mosaic_0001>

<llo_original>
// kernel: tpu_custom_call.1
$region0: #{tpu_custom_call.1}
  #allocation0 [shape = 'u32[]', space=smem, size = 0x4, offset = 0x4, fixed_abs, tag = 'smem constant byte address 0x4 - core index']
  #allocation1 [shape = 'u32[72,128]{1,0:T(1,128)}', space=vmem, size = 0x9000, scoped, tag = 'internal scratch']
  %s0 = inlined_call_operand.hbm [shape: f32[8,16], index: 0, kind: input, shape index: {}]
  %s1 = inlined_call_operand.hbm [shape: f32[8,16], index: 1, kind: input, shape index: {}]
  %s2 = inlined_call_operand.hbm [shape: bf16[288,128], index: 2, kind: input, shape index: {}]
  %s3 = inlined_call_operand.hbm [shape: f32[8,128], index: 3, kind: input, shape index: {}]
  %s4 = inlined_call_operand.hbm [shape: f32[8,128], index: 4, kind: output, shape index: {}]
  %s5 = sld [smem:[#allocation0]]
  $region42: #{tpu_custom_call.1} parent=0
    _
  %s7 = ssub.s32 1, %s5
  %s8 = scalar_select 0, %s7, %s5
  $region1: #{tpu_custom_call.1} parent=0
    #allocation2 [shape = 'u8[4096]{0}', space=vmem, size = 0x1000, scoped, tag = 'input window, operand 0, single buffered']
    #allocation3 [shape = 's32[1]{0}', space=sflag, size = 0x4, scoped, tag = 'scoped memory for tpu_custom_call.1']
    #allocation4 [shape = 's32[1]{0}', space=sflag, size = 0x4, scoped, tag = 'scoped memory for tpu_custom_call.1']
    #allocation5 [shape = 'u8[4096]{0}', space=vmem, size = 0x1000, scoped, tag = 'input window, operand 1, single buffered']
    #allocation6 [shape = 's32[1]{0}', space=sflag, size = 0x4, scoped, tag = 'scoped memory for tpu_custom_call.1']
    #allocation7 [shape = 'u8[73728]{0}', space=vmem, size = 0x12000, scoped, tag = 'input window, operand 2, single buffered']
    #allocation8 [shape = 'u8[4096]{0}', space=vmem, size = 0x1000, scoped, tag = 'input window, operand 3, single buffered']
    #allocation9 [shape = 's32[1]{0}', space=sflag, size = 0x4, scoped, tag = 'scoped memory for tpu_custom_call.1']
    #allocation10 [shape = 'u8[4096]{0}', space=vmem, size = 0x1000, scoped, tag = 'output window, operand 0, single buffered']
    %9 = vsyncpa [#allocation3], 0
    %10 = vsyncpa [#allocation6], 0
    %11 = vsyncpa [#allocation9], 0
    %12 = vsyncpa [#allocation4], 0
    // Predicated region
    $region2: #{tpu_custom_call.1} parent=1 // pred_check
      _
    $region3: #{tpu_custom_call.1} parent=1 // pred_check_branch
      %14 = sbr.rel (0) target = $region5
    $region4: #{tpu_custom_call.1} parent=1 // pred_region
      %16 = vsyncadd [#allocation3], 0
      %s18 = sshll.u32 %s0, 4
      %s19 = int_to_ptr.hbm [resolvable:$true] %s18
      %s20 = sshll.u32 [#allocation2], 4
      %s21 = int_to_ptr.vmem [resolvable:$true] %s20
      %23 = dma.hbm_to_vmem [thread:$0]  %s19, 128, %s21, [#allocation3]
    $region5: #{tpu_custom_call.1} parent=1 // pred_fallthru
      _
    // Predicated region
    $region6: #{tpu_custom_call.1} parent=1 // pred_check
      _
    $region7: #{tpu_custom_call.1} parent=1 // pred_check_branch
      %25 = sbr.rel (0) target = $region9
    $region8: #{tpu_custom_call.1} parent=1 // pred_region
      %27 = vsyncadd [#allocation6], 0
      %s29 = sshll.u32 %s1, 4
      %s30 = int_to_ptr.hbm [resolvable:$true] %s29
      %s31 = sshll.u32 [#allocation5], 4
      %s32 = int_to_ptr.vmem [resolvable:$true] %s31
      %34 = dma.hbm_to_vmem [thread:$0]  %s30, 128, %s32, [#allocation6]
    $region9: #{tpu_custom_call.1} parent=1 // pred_fallthru
      _
    // Predicated region
    $region10: #{tpu_custom_call.1} parent=1 // pred_check
      _
    $region11: #{tpu_custom_call.1} parent=1 // pred_check_branch
      %36 = sbr.rel (0) target = $region13
    $region12: #{tpu_custom_call.1} parent=1 // pred_region
      %38 = vsyncadd [#allocation6], 0
      %s39 = sshll.u32 %s2, 4
      %s40 = int_to_ptr.hbm [resolvable:$true] %s39
      %s41 = sshll.u32 [#allocation7], 4
      %s42 = int_to_ptr.vmem [resolvable:$true] %s41
      %47 = dma.hbm_to_vmem [thread:$0]  %s40, 2304, %s42, [#allocation6], 64, 64, 4
    $region13: #{tpu_custom_call.1} parent=1 // pred_fallthru
      _
    // Predicated region
    $region14: #{tpu_custom_call.1} parent=1 // pred_check
      _
    $region15: #{tpu_custom_call.1} parent=1 // pred_check_branch
      %49 = sbr.rel (0) target = $region17
    $region16: #{tpu_custom_call.1} parent=1 // pred_region
      %51 = vsyncadd [#allocation9], 0
      %s53 = sshll.u32 %s3, 4
      %s54 = int_to_ptr.hbm [resolvable:$true] %s53
      %s55 = sshll.u32 [#allocation8], 4
      %s56 = int_to_ptr.vmem [resolvable:$true] %s55
      %58 = dma.hbm_to_vmem [thread:$0]  %s54, 128, %s56, [#allocation9]
    $region17: #{tpu_custom_call.1} parent=1 // pred_fallthru
      _
    // Predicated region
    $region18: #{tpu_custom_call.1} parent=1 // pred_check
      _
    $region19: #{tpu_custom_call.1} parent=1 // pred_check_branch
      %60 = sbr.rel (0) target = $region21
    $region20: #{tpu_custom_call.1} parent=1 // pred_region
      %62 = dma.done [#allocation3], 128
    $region21: #{tpu_custom_call.1} parent=1 // pred_fallthru
      _
    // Predicated region
    $region22: #{tpu_custom_call.1} parent=1 // pred_check
      _
    $region23: #{tpu_custom_call.1} parent=1 // pred_check_branch
      %64 = sbr.rel (0) target = $region25
    $region24: #{tpu_custom_call.1} parent=1 // pred_region
      %66 = dma.done [#allocation6], 128
    $region25: #{tpu_custom_call.1} parent=1 // pred_fallthru
      _
    // Predicated region
    $region26: #{tpu_custom_call.1} parent=1 // pred_check
      _
    $region27: #{tpu_custom_call.1} parent=1 // pred_check_branch
      %68 = sbr.rel (0) target = $region29
    $region28: #{tpu_custom_call.1} parent=1 // pred_region
      %70 = dma.done [#allocation6], 2304
    $region29: #{tpu_custom_call.1} parent=1 // pred_fallthru
      _
    // Predicated region
    $region30: #{tpu_custom_call.1} parent=1 // pred_check
      _
    $region31: #{tpu_custom_call.1} parent=1 // pred_check_branch
      %72 = sbr.rel (0) target = $region33
    $region32: #{tpu_custom_call.1} parent=1 // pred_region
      %74 = dma.done [#allocation9], 128
    $region33: #{tpu_custom_call.1} parent=1 // pred_fallthru
      _
    %v76 = vld [vmem:[#allocation2] sm:$0xff]
    %v77 = vpack.c.bf16 %v76, %v76
    %v78 = vld [vmem:[#allocation5] sm:$0xff]
    %v79 = vpack.c.bf16 %v78, %v78
    %v80 = vld [vmem:[#allocation7] sm:$0xf]
    %v81 = vld [vmem:[#allocation7 + $0x4] sm:$0xf]
    %v82 = vld [vmem:[#allocation7 + $0x8] sm:$0xf]
    %v83 = vld [vmem:[#allocation7 + $0xc] sm:$0xf]
    %v84 = vld [vmem:[#allocation7 + $0x10] sm:$0xf]
    %v85 = vld [vmem:[#allocation7 + $0x14] sm:$0xf]
    %v86 = vld [vmem:[#allocation7 + $0x18] sm:$0xf]
    %v87 = vld [vmem:[#allocation7 + $0x1c] sm:$0xf]
    %v88 = vld [vmem:[#allocation7 + $0x20] sm:$0xf]
    %v89 = vld [vmem:[#allocation7 + $0x24] sm:$0xf]
    %v90 = vld [vmem:[#allocation7 + $0x28] sm:$0xf]
    %v91 = vld [vmem:[#allocation7 + $0x2c] sm:$0xf]
    %v92 = vld [vmem:[#allocation7 + $0x30] sm:$0xf]
    %v93 = vld [vmem:[#allocation7 + $0x34] sm:$0xf]
    %v94 = vld [vmem:[#allocation7 + $0x38] sm:$0xf]
    %v95 = vld [vmem:[#allocation7 + $0x3c] sm:$0xf]
    %v96 = vld [vmem:[#allocation7 + $0x40] sm:$0xf]
    %v97 = vld [vmem:[#allocation7 + $0x44] sm:$0xf]
    %v98 = vld [vmem:[#allocation7 + $0x48] sm:$0xf]
    %v99 = vld [vmem:[#allocation7 + $0x4c] sm:$0xf]
    %v100 = vld [vmem:[#allocation7 + $0x50] sm:$0xf]
    %v101 = vld [vmem:[#allocation7 + $0x54] sm:$0xf]
    %v102 = vld [vmem:[#allocation7 + $0x58] sm:$0xf]
    %v103 = vld [vmem:[#allocation7 + $0x5c] sm:$0xf]
    %v104 = vld [vmem:[#allocation7 + $0x60] sm:$0xf]
    %v105 = vld [vmem:[#allocation7 + $0x64] sm:$0xf]
    %v106 = vld [vmem:[#allocation7 + $0x68] sm:$0xf]
    %v107 = vld [vmem:[#allocation7 + $0x6c] sm:$0xf]
    %v108 = vld [vmem:[#allocation7 + $0x70] sm:$0xf]
    %v109 = vld [vmem:[#allocation7 + $0x74] sm:$0xf]
    %v110 = vld [vmem:[#allocation7 + $0x78] sm:$0xf]
    %v111 = vld [vmem:[#allocation7 + $0x7c] sm:$0xf]
    %v112 = vld [vmem:[#allocation7 + $0x80] sm:$0xf]
    %v113 = vld [vmem:[#allocation7 + $0x84] sm:$0xf]
    %v114 = vld [vmem:[#allocation7 + $0x88] sm:$0xf]
    %v115 = vld [vmem:[#allocation7 + $0x8c] sm:$0xf]
    %v116 = vld [vmem:[#allocation8] sm:$0x1]
    %v117 = vld [vmem:[#allocation8 + $0x1] sm:$0x1]
    %v118 = vld [vmem:[#allocation8 + $0x2] sm:$0x1]
    %v119 = vperm.slane %v116, 0
    %v122 = vunpack.c.l.b16 %v80
    %v123 = vunpack.c.l.b16 %v81
    %v124 = vpack.c.b16 %v123, %v122
    %vm126 = vcmask 130048
    %v128 = vsel %vm126, %v77, 0
    %130 = vmatpush.bf16.msra.mxu0 0
    %131 = vmatpush.bf16.msra.mxu0 0
    %132 = vmatpush.bf16.msra.mxu0 0
    %133 = vmatpush.bf16.msra.mxu0 0
    %134 = vmatpush.bf16.msra.mxu0 0
    %135 = vmatpush.bf16.msra.mxu0 0
    %136 = vmatpush.bf16.msra.mxu0 0
    %137 = vmatpush.bf16.msra.mxu0 %v124
    %138 = vmatmul.bf16.gmra.mxu0 %v128
    %v139 = vpop.f32.mrf.mxu0
    %v140 = vadd.f32 %v119, %v139
    %v141 = vpop.f32.mrf.mxu0
    %142 = vdwg.mxu0
    %vm143 = vcmp.gt.f32.partialorder %v140, 0.0
    %v144 = vmul.f32 %v140, 0.01
    %v145 = vsel %vm143, %v140, %v144
    %v146 = vpack.c.bf16 %v145, %v145
    %v149 = vunpack.c.l.b16 %v98
    %v150 = vunpack.c.l.b16 %v99
    %v151 = vpack.c.b16 %v150, %v149
    %v154 = vsel %vm126, %v79, 0
    %156 = vmatpush.bf16.msra.mxu0 0
    %157 = vmatpush.bf16.msra.mxu0 0
    %158 = vmatpush.bf16.msra.mxu0 0
    %159 = vmatpush.bf16.msra.mxu0 0
    %160 = vmatpush.bf16.msra.mxu0 0
    %161 = vmatpush.bf16.msra.mxu0 0
    %162 = vmatpush.bf16.msra.mxu0 0
    %163 = vmatpush.bf16.msra.mxu0 %v151
    %164 = vmatmul.bf16.gmra.mxu0 %v154
    %v165 = vpop.f32.mrf.mxu0
    %v166 = vadd.f32 0.0, %v165
    %v167 = vpop.f32.mrf.mxu0
    %168 = vdwg.mxu0
    %v185 = vunpack.c.l.b16 %v82
    %v186 = vunpack.c.l.b16 %v83
    %v187 = vunpack.c.l.b16 %v84
    %v188 = vunpack.c.l.b16 %v85
    %v189 = vunpack.c.l.b16 %v86
    %v190 = vunpack.c.l.b16 %v87
    %v191 = vunpack.c.l.b16 %v88
    %v192 = vunpack.c.l.b16 %v89
    %v193 = vunpack.c.l.b16 %v90
    %v194 = vunpack.c.l.b16 %v91
    %v195 = vunpack.c.l.b16 %v92
    %v196 = vunpack.c.l.b16 %v93
    %v197 = vunpack.c.l.b16 %v94
    %v198 = vunpack.c.l.b16 %v95
    %v199 = vunpack.c.l.b16 %v96
    %v200 = vunpack.c.l.b16 %v97
    %v201 = vpack.c.b16 %v186, %v185
    %v202 = vpack.c.b16 %v188, %v187
    %v203 = vpack.c.b16 %v190, %v189
    %v204 = vpack.c.b16 %v192, %v191
    %v205 = vpack.c.b16 %v194, %v193
    %v206 = vpack.c.b16 %v196, %v195
    %v207 = vpack.c.b16 %v198, %v197
    %v208 = vpack.c.b16 %v200, %v199
    %217 = vmatpush.bf16.msra.mxu0 %v208
    %218 = vmatpush.bf16.msra.mxu0 %v207
    %219 = vmatpush.bf16.msra.mxu0 %v206
    %220 = vmatpush.bf16.msra.mxu0 %v205
    %221 = vmatpush.bf16.msra.mxu0 %v204
    %222 = vmatpush.bf16.msra.mxu0 %v203
    %223 = vmatpush.bf16.msra.mxu0 %v202
    %224 = vmatpush.bf16.msra.mxu0 %v201
    %225 = vmatmul.bf16.gmra.mxu0 %v146
    %v226 = vpop.f32.mrf.mxu0
    %v227 = vadd.f32 %v166, %v226
    %v228 = vpop.f32.mrf.mxu0
    %229 = vdwg.mxu0
    %v230 = vperm.slane %v117, 0
    %v231 = vadd.f32 %v227, %v230
    %vm232 = vcmp.gt.f32.partialorder %v231, 0.0
    %v233 = vmul.f32 %v231, 0.01
    %v234 = vsel %vm232, %v231, %v233
    %v235 = vpack.c.bf16 %v234, %v234
    %v236 = vperm.slane %v118, 0
    %v253 = vunpack.c.l.b16 %v100
    %v254 = vunpack.c.l.b16 %v101
    %v255 = vunpack.c.l.b16 %v102
    %v256 = vunpack.c.l.b16 %v103
    %v257 = vunpack.c.l.b16 %v104
    %v258 = vunpack.c.l.b16 %v105
    %v259 = vunpack.c.l.b16 %v106
    %v260 = vunpack.c.l.b16 %v107
    %v261 = vunpack.c.l.b16 %v108
    %v262 = vunpack.c.l.b16 %v109
    %v263 = vunpack.c.l.b16 %v110
    %v264 = vunpack.c.l.b16 %v111
    %v265 = vunpack.c.l.b16 %v112
    %v266 = vunpack.c.l.b16 %v113
    %v267 = vunpack.c.l.b16 %v114
    %v268 = vunpack.c.l.b16 %v115
    %v269 = vpack.c.b16 %v254, %v253
    %v270 = vpack.c.b16 %v256, %v255
    %v271 = vpack.c.b16 %v258, %v257
    %v272 = vpack.c.b16 %v260, %v259
    %v273 = vpack.c.b16 %v262, %v261
    %v274 = vpack.c.b16 %v264, %v263
    %v275 = vpack.c.b16 %v266, %v265
    %v276 = vpack.c.b16 %v268, %v267
    %285 = vmatpush.bf16.msra.mxu0 %v276
    %286 = vmatpush.bf16.msra.mxu0 %v275
    %287 = vmatpush.bf16.msra.mxu0 %v274
    %288 = vmatpush.bf16.msra.mxu0 %v273
    %289 = vmatpush.bf16.msra.mxu0 %v272
    %290 = vmatpush.bf16.msra.mxu0 %v271
    %291 = vmatpush.bf16.msra.mxu0 %v270
    %292 = vmatpush.bf16.msra.mxu0 %v269
    %293 = vmatmul.bf16.gmra.mxu0 %v235
    %v294 = vpop.f32.mrf.mxu0
    %v295 = vadd.f32 %v236, %v294
    %v296 = vpop.f32.mrf.mxu0
    %297 = vdwg.mxu0
    %298 = vst [vmem:[#allocation10] sm:$0xff] %v295
    // Predicated region
    $region34: #{tpu_custom_call.1} parent=1 // pred_check
      _
    $region35: #{tpu_custom_call.1} parent=1 // pred_check_branch
      %300 = sbr.rel (0) target = $region37
    $region36: #{tpu_custom_call.1} parent=1 // pred_region
      %302 = vsyncadd [#allocation4], 0
      %s304 = sshll.u32 [#allocation10], 4
      %s305 = int_to_ptr.vmem [resolvable:$true] %s304
      %s306 = sshll.u32 %s4, 4
      %s307 = int_to_ptr.hbm [resolvable:$true] %s306
      %309 = dma.vmem_to_hbm [thread:$0]  %s305, 128, %s307, [#allocation4]
    $region37: #{tpu_custom_call.1} parent=1 // pred_fallthru
      _
    // Predicated region
    $region38: #{tpu_custom_call.1} parent=1 // pred_check
      _
    $region39: #{tpu_custom_call.1} parent=1 // pred_check_branch
      %311 = sbr.rel (0) target = $region41
    $region40: #{tpu_custom_call.1} parent=1 // pred_region
      %313 = dma.done [#allocation4], 128
    $region41: #{tpu_custom_call.1} parent=1 // pred_fallthru
      _
    %314 = vsyncpa [#allocation3], 1
    %315 = vsyncpa [#allocation6], 1
    %316 = vsyncpa [#allocation9], 1
    %317 = vsyncpa [#allocation4], 1

</llo_original>
